<compile_context>
chip_gen: v7x
topology: tpu7x:2x2x1
jax: 0.10.0
libtpu: 0.0.40
codegen_flags: <defaults>
</compile_context>

<pallas_src>
import functools

import jax
import jax.numpy as jnp
from jax.experimental import pallas as pl
from jax.experimental.pallas import tpu as pltpu


# --------------------------------------------------------------------------
# Kernel
# --------------------------------------------------------------------------
def _vshaped_kernel(x_ref, o_ref, *, threshold: float, inverse: bool):
    x = x_ref[...]
    t = jnp.asarray(threshold, dtype=x.dtype)
    lo = jnp.minimum(x, t)
    hi = jnp.maximum(x, t)
    o_ref[...] = (hi - lo) if inverse else (lo - hi)


def _vshaped_jnp(x, threshold, inverse):
    t = jnp.asarray(threshold, dtype=x.dtype)
    lo = jnp.minimum(x, t)
    hi = jnp.maximum(x, t)
    return (hi - lo) if inverse else (lo - hi)


# --------------------------------------------------------------------------
# Tiling helpers
# --------------------------------------------------------------------------
def _sublane_min(dtype) -> int:
    itemsize = jnp.dtype(dtype).itemsize
    if itemsize >= 4:
        return 8
    if itemsize == 2:
        return 16
    return 32


def _round_up(a: int, b: int) -> int:
    return ((a + b - 1) // b) * b


def _tpu_config():
    """Best-effort generation detection; conservative, safe defaults."""
    kind = ""
    try:
        kind = jax.devices()[0].device_kind.lower()
    except Exception:
        pass
    if "v7" in kind:
        # v7x: 2 TensorCores / 64 MiB VMEM per core. 8 MiB blocks (pipeline
        # needs ~4x block), and force >=2 (pref. 4) grid blocks for occupancy.
        return {"block_bytes": 8 << 20, "vmem_limit": 48 << 20,
                "min_blocks": 2, "pref_blocks": 4}
    # v5e / v6e: 1 TensorCore / 128 MiB physical VMEM. Bigger blocks, no
    # forced split (a split would only multiply the per-step overhead).
    return {"block_bytes": 12 << 20, "vmem_limit": 64 << 20,
            "min_blocks": 1, "pref_blocks": 1}


# --------------------------------------------------------------------------
# Wrapper
# --------------------------------------------------------------------------
def vshaped(x, threshold=0.0, inverse=False, *, force_pallas=False, donate=False):
    """Apply the V-shaped activation elementwise (any shape, any float dtype).

    Note: `threshold` / `inverse` are treated as compile-time Python constants
    (mirrors the PyTorch module, which builds the threshold in __init__).
    """
    orig_shape = x.shape
    dtype = x.dtype
    total = int(x.size)
    if total == 0:
        return x

    threshold = float(threshold)
    inverse = bool(inverse)
    itemsize = jnp.dtype(dtype).itemsize
    sub_min = _sublane_min(dtype)

    # Pure-XLA fast paths: tiny tensors (launch overhead dominates, XLA can
    # fuse) and lane-unaligned element counts (avoids the pad+slice 3x-traffic
    # path; XLA does masked ragged stores natively at full bandwidth).
    small = total * itemsize < (1 << 20)
    unaligned = total % 128 != 0
    if unaligned or (small and not force_pallas):
        return _vshaped_jnp(x, threshold, inverse)

    cfg = _tpu_config()
    block_bytes = cfg["block_bytes"]

    # --- lane-dense 2D slab layout (no data movement; reshape is a bitcast) --
    cols = next(c for c in (2048, 1024, 512, 256, 128) if total % c == 0)
    rows = total // cols
    x2d = x.reshape(rows, cols)
    row_bytes = cols * itemsize

    # --- pick the block row count ------------------------------------------
    if rows <= sub_min:
        br = rows  # full-extent block (always legal)
    else:
        want = 1
        if cfg["min_blocks"] > 1:
            if rows >= cfg["pref_blocks"] * sub_min:
                want = cfg["pref_blocks"]
            elif rows >= cfg["min_blocks"] * sub_min:
                want = cfg["min_blocks"]
        if want <= 1 and rows * row_bytes <= block_bytes:
            br = rows  # single big block: minimal per-step overhead
        else:
            br = max(sub_min, (block_bytes // row_bytes) // sub_min * sub_min)
            if want > 1:
                # Ensure enough blocks to feed both v7x TensorCores.
                br = min(br, _round_up(pl.cdiv(rows, want), sub_min))
            if br >= rows:
                br = rows

    grid = (pl.cdiv(rows, br),)

    kernel = functools.partial(_vshaped_kernel, threshold=threshold, inverse=inverse)

    call_kwargs = {}
    if donate:
        # Halves HBM footprint when the caller donates x; traffic unchanged.
        call_kwargs["input_output_aliases"] = {0: 0}

    out2d = pl.pallas_call(
        kernel,
        out_shape=jax.ShapeDtypeStruct((rows, cols), dtype),
        grid=grid,
        in_specs=[pl.BlockSpec((br, cols), lambda i: (i, 0))],
        out_specs=pl.BlockSpec((br, cols), lambda i: (i, 0)),
        compiler_params=pltpu.CompilerParams(
            dimension_semantics=("parallel",),
            vmem_limit_bytes=cfg["vmem_limit"],
        ),
        **call_kwargs,
    )(x2d)

    return out2d.reshape(orig_shape)


class VShapedPallas:
    """Mirror of the PyTorch VShaped module (deterministic, no params)."""

    def __init__(self, threshold=0.0, inverse=False):
        self.threshold = float(threshold)
        self.inverse = bool(inverse)

    def __call__(self, x):
        return vshaped(x, self.threshold, self.inverse)


# --------------------------------------------------------------------------
# Self-test
# --------------------------------------------------------------------------
if __name__ == "__main__":
    def ref_fn(x, t, inverse):
        t = jnp.asarray(t, dtype=x.dtype)
        if inverse:
            return jnp.maximum(x, t) - jnp.minimum(x, t)
        return jnp.minimum(x, t) - jnp.maximum(x, t)

    key = jax.random.PRNGKey(0)

    # Module-consistent small shape (NCHW) -> fused jnp fast path.
    x = jax.random.normal(key, (2, 4, 16, 16), dtype=jnp.float32)
    mod = VShapedPallas(threshold=0.0, inverse=False)
    y = jax.block_until_ready(mod(x))
    assert y.shape == x.shape and y.dtype == x.dtype
    assert jnp.allclose(y, ref_fn(x, 0.0, False), atol=1e-6), "small forward mismatch"

    # Force the Pallas kernel on the same small tensor (single-block path).
    y_p = jax.block_until_ready(vshaped(x, 0.5, inverse=True, force_pallas=True))
    assert jnp.allclose(y_p, ref_fn(x, 0.5, True), atol=1e-6), "forced-pallas mismatch"

    # Larger tensor (16 MiB f32): exercises the tiled / multi-block path.
    xl = jax.random.normal(jax.random.PRNGKey(1), (2, 4, 512, 1024), dtype=jnp.float32)
    yl = jax.block_until_ready(vshaped(xl, -0.1, inverse=False))
    assert jnp.allclose(yl, ref_fn(xl, -0.1, False), atol=1e-6), "tiled forward mismatch"

    # bf16 path (exercises dtype-aware sublane tiling).
    xh = xl.astype(jnp.bfloat16)
    yh = jax.block_until_ready(vshaped(xh, 0.25, inverse=True, force_pallas=True))
    assert jnp.allclose(
        yh.astype(jnp.float32), ref_fn(xh, 0.25, True).astype(jnp.float32), atol=1e-2
    ), "bf16 mismatch"

    # Lane-unaligned element count (2*3*7*7 = 294) -> pure-XLA fallback.
    xo = jax.random.normal(jax.random.PRNGKey(2), (2, 3, 7, 7), dtype=jnp.float32)
    yo = jax.block_until_ready(vshaped(xo, -0.1, inverse=False))
    assert jnp.allclose(yo, ref_fn(xo, -0.1, False), atol=1e-6), "unaligned mismatch"

    print("KERNEL_OK")
</pallas_src>

<mosaic_0001>
module attributes {stable_mosaic.version = 11 : i64} {
  func.func @_vshaped_kernel(%arg0: i32, %arg1: memref<1x2048xf32, #tpu.memory_space<vmem>>, %arg2: memref<1x2048xf32, #tpu.memory_space<vmem>>) attributes {dimension_semantics = [#tpu.dimension_semantics<parallel>], iteration_bounds = array<i64: 1>, scalar_prefetch = 0 : i64, scratch_operands = 0 : i64, tpu.core_type = #tpu.core_type<tc>, window_params = [{transform_indices = @transform_0, window_bounds = array<i64: 1, 2048>}, {transform_indices = @transform_1, window_bounds = array<i64: 1, 2048>}]} {
    %c0 = arith.constant 0 : index
    %c0_0 = arith.constant 0 : index
    %0 = vector.load %arg1[%c0, %c0_0] : memref<1x2048xf32, #tpu.memory_space<vmem>>, vector<1x2048xf32>
    %cst = arith.constant 5.000000e-01 : f32
    %1 = vector.broadcast %cst : f32 to vector<1x2048xf32>
    %2 = arith.minimumf %0, %1 : vector<1x2048xf32>
    %cst_1 = arith.constant 5.000000e-01 : f32
    %3 = vector.broadcast %cst_1 : f32 to vector<1x2048xf32>
    %4 = arith.maximumf %0, %3 : vector<1x2048xf32>
    %5 = arith.subf %4, %2 : vector<1x2048xf32>
    %c0_2 = arith.constant 0 : index
    %c0_3 = arith.constant 0 : index
    %6 = vector.load %arg2[%c0_2, %c0_3] : memref<1x2048xf32, #tpu.memory_space<vmem>>, vector<1x2048xf32>
    tpu.vector_store %arg2[%c0_2, %c0_3], %5 {strides = array<i32>} : memref<1x2048xf32, #tpu.memory_space<vmem>>, vector<1x2048xf32>,
    return
  }
  func.func @transform_0(%arg0: i32) -> (i32, i32) {
    %c0_i32 = arith.constant 0 : i32
    %c0_i32_0 = arith.constant 0 : i32
    return %arg0, %c0_i32 : i32, i32
  }
  func.func @transform_1(%arg0: i32) -> (i32, i32) {
    %c0_i32 = arith.constant 0 : i32
    %c0_i32_0 = arith.constant 0 : i32
    return %arg0, %c0_i32 : i32, i32
  }
}

</mosaic_0001>

<llo_original>
// kernel: tpu_custom_call.1
$region0: #{tpu_custom_call.1}
  #allocation0 [shape = 'u32[]', space=smem, size = 0x4, offset = 0x4, fixed_abs, tag = 'smem constant byte address 0x4 - core index']
  #allocation1 [shape = 'u32[144,128]{1,0:T(1,128)}', space=vmem, size = 0x12000, scoped, tag = 'internal scratch']
  %s0 = inlined_call_operand.hbm [shape: f32[1,2048], index: 0, kind: input, shape index: {}]
  %s1 = inlined_call_operand.hbm [shape: f32[1,2048], index: 1, kind: output, shape index: {}]
  %s2 = sld [smem:[#allocation0]]
  $region18: #{tpu_custom_call.1} parent=0
    _
  %s4 = ssub.s32 1, %s2
  %s5 = scalar_select 0, %s4, %s2
  $region1: #{tpu_custom_call.1} parent=0
    #allocation2 [shape = 'u8[8192]{0}', space=vmem, size = 0x2000, scoped, tag = 'input window, operand 0, single buffered']
    #allocation3 [shape = 's32[1]{0}', space=sflag, size = 0x4, scoped, tag = 'scoped memory for tpu_custom_call.1']
    #allocation4 [shape = 's32[1]{0}', space=sflag, size = 0x4, scoped, tag = 'scoped memory for tpu_custom_call.1']
    #allocation5 [shape = 'u8[8192]{0}', space=vmem, size = 0x2000, scoped, tag = 'output window, operand 0, single buffered']
    %6 = vsyncpa [#allocation3], 0
    %7 = vsyncpa [#allocation4], 0
    // Predicated region
    $region2: #{tpu_custom_call.1} parent=1 // pred_check
      _
    $region3: #{tpu_custom_call.1} parent=1 // pred_check_branch
      %9 = sbr.rel (0) target = $region5
    $region4: #{tpu_custom_call.1} parent=1 // pred_region
      %s11 = ssub.s32 256, 256
      %12 = vsyncadd [#allocation3], %s11
      %s14 = sshll.u32 [#allocation2], 4
      %s15 = int_to_ptr.vmem [resolvable:$true] %s14
      %17 = dma.hbm_to_vmem [thread:$0]  %s0, 256, %s15, [#allocation3]
    $region5: #{tpu_custom_call.1} parent=1 // pred_fallthru
      _
    // Predicated region
    $region6: #{tpu_custom_call.1} parent=1 // pred_check
      _
    $region7: #{tpu_custom_call.1} parent=1 // pred_check_branch
      %19 = sbr.rel (0) target = $region9
    $region8: #{tpu_custom_call.1} parent=1 // pred_region
      %20 = dma.done [#allocation3], 256
    $region9: #{tpu_custom_call.1} parent=1 // pred_fallthru
      _
    %v21 = vld [vmem:[#allocation2] sm:$0xff]
    %v22 = vld [vmem:[#allocation2 + $0x8] sm:$0xff]
    %v23 = vmin.f32 %v21, 0.5
    %v24 = vmin.f32 %v22, 0.5
    %v25 = vmax.f32 %v21, 0.5
    %v26 = vmax.f32 %v22, 0.5
    %v27 = vsub.f32 %v25, %v23
    %v28 = vsub.f32 %v26, %v24
    %29 = vst [vmem:[#allocation5] sm:$0xff] %v27
    %30 = vst [vmem:[#allocation5 + $0x8] sm:$0xff] %v28
    // Predicated region
    $region10: #{tpu_custom_call.1} parent=1 // pred_check
      _
    $region11: #{tpu_custom_call.1} parent=1 // pred_check_branch
      %32 = sbr.rel (0) target = $region13
    $region12: #{tpu_custom_call.1} parent=1 // pred_region
      %s34 = ssub.s32 256, 256
      %35 = vsyncadd [#allocation4], %s34
      %s37 = sshll.u32 [#allocation5], 4
      %s38 = int_to_ptr.vmem [resolvable:$true] %s37
      %40 = dma.vmem_to_hbm [thread:$0]  %s38, 256, %s1, [#allocation4]
    $region13: #{tpu_custom_call.1} parent=1 // pred_fallthru
      _
    // Predicated region
    $region14: #{tpu_custom_call.1} parent=1 // pred_check
      _
    $region15: #{tpu_custom_call.1} parent=1 // pred_check_branch
      %42 = sbr.rel (0) target = $region17
    $region16: #{tpu_custom_call.1} parent=1 // pred_region
      %43 = dma.done [#allocation4], 256
    $region17: #{tpu_custom_call.1} parent=1 // pred_fallthru
      _
    %44 = vsyncpa [#allocation3], 1
    %45 = vsyncpa [#allocation4], 1

</llo_original>
